<compile_context>
chip_gen: v5e
topology: v5e:2x2
jax: 0.10.0
libtpu: 0.0.40
codegen_flags: <defaults>
</compile_context>

<pallas_src>
import functools

import jax
import jax.numpy as jnp
from jax.experimental import pallas as pl
from jax.experimental.pallas import tpu as pltpu


def _circle_ce_kernel(inp_ref, label_ref, out_ref, *, m: float, gamma: float,
                      n_total: int, tile_n: int):
    i = pl.program_id(0)

    x = inp_ref[...].astype(jnp.float32)        # (tile_n, C), cast in-kernel
    lab = label_ref[...]                        # (tile_n, 1) int32
    tn, c = x.shape

    # One-hot mask of label positions (replaces torch gather / scatter_).
    col = jax.lax.broadcasted_iota(jnp.int32, (tn, c), 1)
    is_lab = col == lab                         # broadcast of (tile_n, 1)

    # Fused circle-loss reweighting (single select per element):
    #   non-label: a = max(x + m, 0),         sigma = m
    #   label:     a = max(1 + m - x, 0),     sigma = 1 - m
    logit_pos = jnp.maximum(x + m, 0.0) * (x - m)
    logit_lab = jnp.maximum((1.0 + m) - x, 0.0) * (x - (1.0 - m))
    logits = jnp.where(is_lab, logit_lab, logit_pos) * gamma   # (tile_n, C)

    # Cross-entropy per row: logsumexp(logits) - logits[label]
    mx = jnp.max(logits, axis=1, keepdims=True)
    lse = jnp.log(jnp.sum(jnp.exp(logits - mx), axis=1, keepdims=True)) + mx
    tgt = jnp.sum(jnp.where(is_lab, logits, 0.0), axis=1, keepdims=True)
    per_row = lse - tgt                         # (tile_n, 1)

    # Mask padded rows of the (possibly ragged) last tile.
    row = jax.lax.broadcasted_iota(jnp.int32, (tn, 1), 0)
    valid = (i * tile_n + row) < n_total
    out_ref[...] = jnp.where(valid, per_row, 0.0)


def circle_loss_like_ce(inp: jax.Array, label: jax.Array,
                        m: float, gamma: float, tile_n: int = 512) -> jax.Array:
    """inp: (N, C) float (any float dtype), label: (N,) int -> scalar f32 loss."""
    n, c = inp.shape
    itemsize = jnp.dtype(inp.dtype).itemsize
    label2d = label.astype(jnp.int32).reshape(n, 1)

    # Size TILE_N: keep 2 (double buffer) x tile_n x C x itemsize <= ~16 MiB,
    # multiple of 8 (sublane), no larger than N rounded up to 8.
    n_pad8 = -(-n // 8) * 8
    max_rows = max(8, ((8 * 2**20) // (c * itemsize)) // 8 * 8)
    tile_n = int(max(8, (min(tile_n, max_rows, n_pad8) // 8) * 8))

    num_tiles = pl.cdiv(n, tile_n)
    n_pad = num_tiles * tile_n

    kernel = functools.partial(_circle_ce_kernel, m=float(m), gamma=float(gamma),
                               n_total=n, tile_n=tile_n)

    cost = pl.CostEstimate(
        flops=12 * n * c,
        transcendentals=n * c + n,
        bytes_accessed=n * c * itemsize + n * 4 + n_pad * 4,
    )

    per_row = pl.pallas_call(
        kernel,
        out_shape=jax.ShapeDtypeStruct((n_pad, 1), jnp.float32),
        grid_spec=pltpu.PrefetchScalarGridSpec(
            num_scalar_prefetch=0,
            grid=(num_tiles,),
            in_specs=[
                pl.BlockSpec((tile_n, c), lambda i: (i, 0)),
                pl.BlockSpec((tile_n, 1), lambda i: (i, 0)),
            ],
            out_specs=pl.BlockSpec((tile_n, 1), lambda i: (i, 0)),
        ),
        compiler_params=pltpu.CompilerParams(
            dimension_semantics=("parallel",),
            vmem_limit_bytes=32 * 1024 * 1024,
        ),
        cost_estimate=cost,
    )(inp, label2d)

    # Padded rows are already zeroed in-kernel; divide by the true N.
    return jnp.sum(per_row) / n


def _reference(inp, label, m, gamma):
    """Pure-JAX reference mirroring the PyTorch forward (sanity check)."""
    n, c = inp.shape
    x = inp.astype(jnp.float32)
    onehot = jax.nn.one_hot(label, c, dtype=bool)
    a = jnp.where(onehot, jnp.maximum(-x + 1.0 + m, 0.0), jnp.maximum(x + m, 0.0))
    sigma = jnp.where(onehot, 1.0 - m, m)
    logits = a * (x - sigma) * gamma
    logp = jax.nn.log_softmax(logits, axis=1)
    return -jnp.mean(jnp.sum(jnp.where(onehot, logp, 0.0), axis=1))


if __name__ == "__main__":
    # Deterministic "module params" (from __init__(m, gamma)):
    M = 0.25
    GAMMA = 64.0

    key = jax.random.PRNGKey(0)
    k1, k2 = jax.random.split(key)
    N, C = 8, 16                                 # small (batch, num_classes)
    inp = jax.random.normal(k1, (N, C), dtype=jnp.float32)
    label = jax.random.randint(k2, (N,), 0, C, dtype=jnp.int32)

    loss = circle_loss_like_ce(inp, label, M, GAMMA)
    loss = jax.block_until_ready(loss)

    ref = _reference(inp, label, M, GAMMA)
    assert jnp.allclose(loss, ref, rtol=1e-5, atol=1e-5), (loss, ref)

    # Also exercise a ragged / multi-tile / bf16 path (N not a multiple of tile).
    k3, k4 = jax.random.split(k1)
    N2, C2 = 37, 256
    inp2 = jax.random.normal(k3, (N2, C2), dtype=jnp.bfloat16)
    label2 = jax.random.randint(k4, (N2,), 0, C2, dtype=jnp.int32)
    loss2 = jax.block_until_ready(circle_loss_like_ce(inp2, label2, M, GAMMA, tile_n=16))
    ref2 = _reference(inp2, label2, M, GAMMA)
    assert jnp.allclose(loss2, ref2, rtol=2e-2, atol=2e-2), (loss2, ref2)

    print("KERNEL_OK")
</pallas_src>

<mosaic_0001>
module attributes {stable_mosaic.version = 11 : i64} {
  func.func @_circle_ce_kernel(%arg0: i32, %arg1: memref<8x16xf32, #tpu.memory_space<vmem>>, %arg2: memref<8x1xi32, #tpu.memory_space<vmem>>, %arg3: memref<8x1xf32, #tpu.memory_space<vmem>>) attributes {dimension_semantics = [#tpu.dimension_semantics<parallel>], iteration_bounds = array<i64: 1>, scalar_prefetch = 0 : i64, scratch_operands = 0 : i64, tpu.core_type = #tpu.core_type<tc>, window_params = [{transform_indices = @transform_0, window_bounds = array<i64: 8, 16>}, {transform_indices = @transform_1, window_bounds = array<i64: 8, 1>}, {transform_indices = @transform_2, window_bounds = array<i64: 8, 1>}]} {
    %c0 = arith.constant 0 : index
    %c0_0 = arith.constant 0 : index
    %0 = vector.load %arg1[%c0, %c0_0] : memref<8x16xf32, #tpu.memory_space<vmem>>, vector<8x16xf32>
    %c0_1 = arith.constant 0 : index
    %c0_2 = arith.constant 0 : index
    %1 = vector.load %arg2[%c0_1, %c0_2] : memref<8x1xi32, #tpu.memory_space<vmem>>, vector<8x1xi32>
    %2 = tpu.iota {dimensions = array<i32: 1>} : vector<8x16xi32>
    %3 = vector.broadcast %1 : vector<8x1xi32> to vector<8x16xi32>
    %4 = arith.cmpi eq, %2, %3 : vector<8x16xi32>
    %cst = arith.constant 2.500000e-01 : f32
    %5 = vector.broadcast %cst : f32 to vector<8x16xf32>
    %6 = arith.addf %0, %5 : vector<8x16xf32>
    %cst_3 = arith.constant 0.000000e+00 : f32
    %7 = vector.broadcast %cst_3 : f32 to vector<8x16xf32>
    %8 = arith.maximumf %6, %7 : vector<8x16xf32>
    %cst_4 = arith.constant 2.500000e-01 : f32
    %9 = vector.broadcast %cst_4 : f32 to vector<8x16xf32>
    %10 = arith.subf %0, %9 : vector<8x16xf32>
    %11 = arith.mulf %8, %10 : vector<8x16xf32>
    %cst_5 = arith.constant 1.250000e+00 : f32
    %12 = vector.broadcast %cst_5 : f32 to vector<8x16xf32>
    %13 = arith.subf %12, %0 : vector<8x16xf32>
    %cst_6 = arith.constant 0.000000e+00 : f32
    %14 = vector.broadcast %cst_6 : f32 to vector<8x16xf32>
    %15 = arith.maximumf %13, %14 : vector<8x16xf32>
    %cst_7 = arith.constant 7.500000e-01 : f32
    %16 = vector.broadcast %cst_7 : f32 to vector<8x16xf32>
    %17 = arith.subf %0, %16 : vector<8x16xf32>
    %18 = arith.mulf %15, %17 : vector<8x16xf32>
    %19 = arith.select %4, %18, %11 : vector<8x16xi1>, vector<8x16xf32>
    %cst_8 = arith.constant 6.400000e+01 : f32
    %20 = vector.broadcast %cst_8 : f32 to vector<8x16xf32>
    %21 = arith.mulf %19, %20 : vector<8x16xf32>
    %cst_9 = arith.constant dense<0xFF800000> : vector<8xf32>
    %22 = vector.multi_reduction <maximumf>, %21, %cst_9 [1] : vector<8x16xf32> to vector<8xf32>
    %23 = vector.shape_cast %22 : vector<8xf32> to vector<8x1xf32>
    %24 = vector.broadcast %23 : vector<8x1xf32> to vector<8x16xf32>
    %25 = arith.subf %21, %24 : vector<8x16xf32>
    %26 = math.exp %25 : vector<8x16xf32>
    %cst_10 = arith.constant dense<0.000000e+00> : vector<8xf32>
    %27 = vector.multi_reduction <add>, %26, %cst_10 [1] : vector<8x16xf32> to vector<8xf32>
    %28 = vector.shape_cast %27 : vector<8xf32> to vector<8x1xf32>
    %29 = math.log %28 : vector<8x1xf32>
    %30 = arith.addf %29, %23 : vector<8x1xf32>
    %cst_11 = arith.constant 0.000000e+00 : f32
    %31 = vector.broadcast %cst_11 : f32 to vector<8x16xf32>
    %32 = arith.select %4, %21, %31 : vector<8x16xi1>, vector<8x16xf32>
    %cst_12 = arith.constant dense<0.000000e+00> : vector<8xf32>
    %33 = vector.multi_reduction <add>, %32, %cst_12 [1] : vector<8x16xf32> to vector<8xf32>
    %34 = vector.shape_cast %33 : vector<8xf32> to vector<8x1xf32>
    %35 = arith.subf %30, %34 : vector<8x1xf32>
    %36 = tpu.iota {dimensions = array<i32: 0>} : vector<8x1xi32>
    %c8_i32 = arith.constant 8 : i32
    %37 = arith.muli %arg0, %c8_i32 : i32
    %38 = vector.broadcast %37 : i32 to vector<8x1xi32>
    %39 = arith.addi %38, %36 : vector<8x1xi32>
    %c8_i32_13 = arith.constant 8 : i32
    %40 = vector.broadcast %c8_i32_13 : i32 to vector<8x1xi32>
    %41 = arith.cmpi slt, %39, %40 : vector<8x1xi32>
    %cst_14 = arith.constant 0.000000e+00 : f32
    %42 = vector.broadcast %cst_14 : f32 to vector<8x1xf32>
    %43 = arith.select %41, %35, %42 : vector<8x1xi1>, vector<8x1xf32>
    %c0_15 = arith.constant 0 : index
    %c0_16 = arith.constant 0 : index
    %44 = vector.load %arg3[%c0_15, %c0_16] : memref<8x1xf32, #tpu.memory_space<vmem>>, vector<8x1xf32>
    tpu.vector_store %arg3[%c0_15, %c0_16], %43 {strides = array<i32>} : memref<8x1xf32, #tpu.memory_space<vmem>>, vector<8x1xf32>,
    return
  }
  func.func @transform_0(%arg0: i32) -> (i32, i32) {
    %c0_i32 = arith.constant 0 : i32
    %c0_i32_0 = arith.constant 0 : i32
    return %arg0, %c0_i32 : i32, i32
  }
  func.func @transform_1(%arg0: i32) -> (i32, i32) {
    %c0_i32 = arith.constant 0 : i32
    %c0_i32_0 = arith.constant 0 : i32
    return %arg0, %c0_i32 : i32, i32
  }
  func.func @transform_2(%arg0: i32) -> (i32, i32) {
    %c0_i32 = arith.constant 0 : i32
    %c0_i32_0 = arith.constant 0 : i32
    return %arg0, %c0_i32 : i32, i32
  }
}

</mosaic_0001>

<llo_original>
// kernel: tpu_custom_call.1
$region0: #{tpu_custom_call.1}
  #allocation0 [shape = 'u32[]', space=smem, size = 0x4, offset = 0x4, fixed_abs, tag = 'smem constant byte address 0x4 - core index']
  #allocation1 [shape = 'u32[72,128]{1,0:T(1,128)}', space=vmem, size = 0x9000, scoped, tag = 'internal scratch']
  %s0 = inlined_call_operand.vmem [shape: f32[8,16], index: 0, kind: input, shape index: {}]
  %s1 = inlined_call_operand.vmem [shape: s32[8,1], index: 1, kind: input, shape index: {}]
  %s2 = inlined_call_operand.vmem [shape: f32[8,1], index: 2, kind: output, shape index: {}]
  %s3 = sld [smem:[#allocation0]]
  $region18: #{tpu_custom_call.1} parent=0
    _
  %s5 = ssub.s32 1, %s3
  %s6 = scalar_select 0, %s5, %s3
  // Predicated region
  $region2: #{tpu_custom_call.1} parent=0 // pred_check
    _
  $region3: #{tpu_custom_call.1} parent=0 // pred_check_branch
    %8 = sbr.rel (0) target = $region5
  $region4: #{tpu_custom_call.1} parent=0 // pred_region
    _
  $region5: #{tpu_custom_call.1} parent=0 // pred_fallthru
    _
  // Predicated region
  $region6: #{tpu_custom_call.1} parent=0 // pred_check
    _
  $region7: #{tpu_custom_call.1} parent=0 // pred_check_branch
    %10 = sbr.rel (0) target = $region9
  $region8: #{tpu_custom_call.1} parent=0 // pred_region
    _
  $region9: #{tpu_custom_call.1} parent=0 // pred_fallthru
    _
  %v11 = vld [vmem:[%s0] sm:$0xff]
  %v12 = vld [vmem:[%s1] sm:$0xff]
  %v13 = vlaneseq
  %v14 = vand.u32 %v13, 127
  %15 = vset.pattern.permute.xlu0 0
  %16 = vperm.xlu0 %15, %v12
  %v17 = vpop.permute.xlu0 %16
  %vm18 = vcmp.eq.s32.totalorder %v14, %v17
  %v19 = vadd.f32 %v11, 0.25
  %v20 = vmax.f32 %v19, 0.0
  %v21 = vsub.f32 %v11, 0.25
  %v22 = vmul.f32 %v20, %v21
  %v23 = vsub.f32 1.25, %v11
  %v24 = vmax.f32 %v23, 0.0
  %v25 = vsub.f32 %v11, 0.75
  %v26 = vmul.f32 %v24, %v25
  %v27 = vsel %vm18, %v26, %v22
  %v28 = vmul.f32 %v27, 64.0
  %vm29 = vcmask 130048
  %v30 = vsel %vm29, %v28, -inf
  %31 = vmax.xlane.f32.xlu0 %v30
  %v32 = vpop.xlane.xlu0 %31
  %v33 = vsub.f32 %v28, %v32
  %v34 = vmul.f32 %v33, 1.442695
  %v35 = vpow.pop %v34
  %v36 = vsel %vm29, %v35, 0.0
  %37 = vadd.xlane.f32.xlu0 %v36
  %v38 = vpop.xlane.xlu0 %37
  %v39 = vlog2.pop %v38
  %v40 = vmul.f32 %v39, 0.6931472
  %v41 = vadd.f32 %v40, %v32
  %v42 = vsel %vm18, %v28, 0.0
  %v43 = vsel %vm29, %v42, 0.0
  %44 = vadd.xlane.f32.xlu0 %v43
  %v45 = vpop.xlane.xlu0 %44
  %v46 = vsub.f32 %v41, %v45
  %v47 = vlaneseq
  %v48 = vshrl.u32 %v47, 7
  %s49 = smul.u32 0, 8
  %v50 = vstv %s49
  %v51 = vadd.s32 %v50, %v48
  %vm52 = vcmp.lt.s32.totalorder %v51, 8
  %v53 = vsel %vm52, %v46, 0.0
  %vm54 = vcmask 7168
  %55 = vst.msk [vmem:[%s2] sm:$0xff] %vm54, %v53
  // Predicated region
  $region10: #{tpu_custom_call.1} parent=0 // pred_check
    _
  $region11: #{tpu_custom_call.1} parent=0 // pred_check_branch
    %57 = sbr.rel (0) target = $region13
  $region12: #{tpu_custom_call.1} parent=0 // pred_region
    _
  $region13: #{tpu_custom_call.1} parent=0 // pred_fallthru
    _
  // Predicated region
  $region14: #{tpu_custom_call.1} parent=0 // pred_check
    _
  $region15: #{tpu_custom_call.1} parent=0 // pred_check_branch
    %59 = sbr.rel (0) target = $region17
  $region16: #{tpu_custom_call.1} parent=0 // pred_region
    _
  $region17: #{tpu_custom_call.1} parent=0 // pred_fallthru
    _

</llo_original>
